<compile_context>
chip_gen: v6e
topology: v6e:2x2x1
jax: 0.10.0
libtpu: 0.0.40
codegen_flags: <defaults>
</compile_context>

<pallas_src>
import functools
import math

import jax
import jax.numpy as jnp
from jax.experimental import pallas as pl
from jax.experimental.pallas import tpu as pltpu


def _attention_kernel(compute_dtype,
                      batch_ref, emb_ref, w_ref,            # inputs
                      out_ref,                              # output (Bp, D)
                      sum_acc, cnt_acc, tg_scr, rep_acc):   # VMEM scratch
    phase = pl.program_id(0)       # 0: pooled global context, 1: scores + add-pool
    k = pl.program_id(1)           # N-tile index
    nk = pl.num_programs(1)

    bp = sum_acc.shape[0]
    tn = emb_ref.shape[0]

    batch_ids = batch_ref[...]                              # (1, tn) int32, -1 = padding
    emb = emb_ref[...]                                       # (tn, D)
    emb_c = emb.astype(compute_dtype)

    graph_ids = jax.lax.broadcasted_iota(jnp.int32, (bp, tn), 0)
    member = (graph_ids == batch_ids).astype(jnp.float32)    # (Bp, tn), exact {0, 1}

    @pl.when(jnp.logical_and(phase == 0, k == 0))
    def _init():
        sum_acc[...] = jnp.zeros_like(sum_acc)
        cnt_acc[...] = jnp.zeros_like(cnt_acc)
        rep_acc[...] = jnp.zeros_like(rep_acc)

    @pl.when(phase == 0)
    def _pool():
        # Segment-sum of raw embeddings: (Bp, tn) @ (tn, D) on the MXU.
        sum_acc[...] += jnp.dot(member.astype(compute_dtype), emb_c,
                                preferred_element_type=jnp.float32)
        cnt_acc[...] += jnp.sum(member, axis=1, keepdims=True)

    @pl.when(jnp.logical_and(phase == 0, k == nk - 1))
    def _finalize_context():
        inv_cnt = 1.0 / jnp.maximum(cnt_acc[...], 1.0)                   # (Bp, 1)
        gc = jnp.dot(sum_acc[...].astype(compute_dtype),
                     w_ref[...].astype(compute_dtype),
                     preferred_element_type=jnp.float32) * inv_cnt       # (Bp, D)
        tg_scr[...] = jnp.tanh(gc)

    @pl.when(phase == 1)
    def _score_and_pool():
        tg = tg_scr[...]                                                  # (Bp, D) f32
        # S[b, j] = tg_b . emb_j  -> (Bp, tn); contraction over D, lane-dense.
        s = jax.lax.dot_general(tg.astype(compute_dtype), emb_c,
                                dimension_numbers=(((1,), (1,)), ((), ())),
                                preferred_element_type=jnp.float32)
        gated = jax.nn.sigmoid(s) * member          # mask other graphs / padded nodes
        rep_acc[...] += jnp.dot(gated.astype(compute_dtype), emb_c,
                                preferred_element_type=jnp.float32)

    @pl.when(jnp.logical_and(phase == 1, k == nk - 1))
    def _write():
        out_ref[...] = rep_acc[...].astype(out_ref.dtype)


def attention_module(embedding, weight, batch, num_graphs, *,
                     tile_n=256, compute_dtype=jnp.float32):
    """embedding: (N, D), weight: (D, D), batch: (N,) int -> (num_graphs, D)."""
    N, D = embedding.shape
    assert weight.shape == (D, D)

    bp = pl.cdiv(num_graphs, 8) * 8                       # sublane-aligned graph rows
    tn = max(128, (min(tile_n, 1024) // 128) * 128)       # lane-aligned N tile
    np_ = pl.cdiv(N, tn) * tn
    nk = np_ // tn

    emb_p = jnp.pad(embedding, ((0, np_ - N), (0, 0)))
    batch_p = jnp.pad(batch.astype(jnp.int32), (0, np_ - N),
                      constant_values=-1).reshape(1, np_)

    kernel = functools.partial(_attention_kernel, compute_dtype)

    out = pl.pallas_call(
        kernel,
        out_shape=jax.ShapeDtypeStruct((bp, D), embedding.dtype),
        grid_spec=pltpu.PrefetchScalarGridSpec(
            num_scalar_prefetch=0,
            grid=(2, nk),                                     # (phase, N tile)
            in_specs=[
                pl.BlockSpec((1, tn), lambda p, k: (0, k)),   # batch ids
                pl.BlockSpec((tn, D), lambda p, k: (k, 0)),   # embedding tile
                pl.BlockSpec((D, D), lambda p, k: (0, 0)),    # weight (resident)
            ],
            out_specs=pl.BlockSpec((bp, D), lambda p, k: (0, 0)),
            scratch_shapes=[
                pltpu.VMEM((bp, D), jnp.float32),   # per-graph sum of embeddings
                pltpu.VMEM((bp, 1), jnp.float32),   # per-graph node counts
                pltpu.VMEM((bp, D), jnp.float32),   # tanh(global context)
                pltpu.VMEM((bp, D), jnp.float32),   # weighted add-pool accumulator
            ]),
        compiler_params=pltpu.CompilerParams(
            dimension_semantics=("arbitrary", "arbitrary"),
            vmem_limit_bytes=32 * 1024 * 1024),
    )(batch_p, emb_p, weight)

    return out[:num_graphs]


def _reference(embedding, weight, batch, num_graphs):
    """Pure-JAX reference of the PyTorch forward (segment ops)."""
    transformed = embedding @ weight
    seg_sum = jax.ops.segment_sum(transformed, batch, num_segments=num_graphs)
    cnt = jax.ops.segment_sum(jnp.ones((embedding.shape[0],), jnp.float32),
                              batch, num_segments=num_graphs)
    global_context = seg_sum / jnp.maximum(cnt, 1.0)[:, None]
    tg = jnp.tanh(global_context)
    scores = jax.nn.sigmoid(jnp.sum(embedding * tg[batch], axis=-1))
    return jax.ops.segment_sum(scores[:, None] * embedding, batch,
                               num_segments=num_graphs)


if __name__ == "__main__":
    key = jax.random.PRNGKey(0)
    k_emb, k_w = jax.random.split(key)

    # args.hidden_dim[-1] = 32; small batched graph: 8 nodes across 2 graphs.
    hidden_dim = 32
    num_nodes = 8
    num_graphs = 2

    embedding = jax.random.normal(k_emb, (num_nodes, hidden_dim), dtype=jnp.float32)
    batch = jnp.array([0, 0, 0, 0, 1, 1, 1, 1], dtype=jnp.int32)

    # Deterministic xavier_uniform_-style init for weight_matrix (D, D).
    bound = math.sqrt(6.0 / (hidden_dim + hidden_dim))
    weight = jax.random.uniform(k_w, (hidden_dim, hidden_dim),
                                dtype=jnp.float32, minval=-bound, maxval=bound)

    out = jax.block_until_ready(attention_module(embedding, weight, batch, num_graphs))
    ref = _reference(embedding, weight, batch, num_graphs)
    assert out.shape == (num_graphs, hidden_dim)
    assert jnp.allclose(out, ref, atol=1e-5, rtol=1e-5), "f32 kernel mismatch vs reference"

    # bf16-MXU path (v5e/v6e/v7x recommendation); f32 accumulation, looser tolerance.
    out_bf16 = jax.block_until_ready(
        attention_module(embedding, weight, batch, num_graphs,
                         compute_dtype=jnp.bfloat16))
    assert jnp.allclose(out_bf16, ref, atol=1e-1, rtol=5e-2), "bf16 kernel mismatch"

    # Larger ragged case exercising multi-tile streaming accumulation (nk > 1).
    k1, k2 = jax.random.split(jax.random.PRNGKey(1))
    n_big, b_big = 700, 5
    emb_big = jax.random.normal(k1, (n_big, hidden_dim), dtype=jnp.float32)
    batch_big = jnp.sort(jax.random.randint(k2, (n_big,), 0, b_big)).astype(jnp.int32)
    out_big = jax.block_until_ready(
        attention_module(emb_big, weight, batch_big, b_big, tile_n=256))
    ref_big = _reference(emb_big, weight, batch_big, b_big)
    assert out_big.shape == (b_big, hidden_dim)
    assert jnp.allclose(out_big, ref_big, atol=1e-4, rtol=1e-4), "multi-tile mismatch"

    print("KERNEL_OK")
</pallas_src>

<mosaic_0001>
module attributes {stable_mosaic.version = 11 : i64} {
  func.func @_attention_kernel(%arg0: i32, %arg1: i32, %arg2: memref<1x256xi32, #tpu.memory_space<vmem>>, %arg3: memref<256x32xf32, #tpu.memory_space<vmem>>, %arg4: memref<32x32xf32, #tpu.memory_space<vmem>>, %arg5: memref<8x32xf32, #tpu.memory_space<vmem>>, %arg6: memref<8x32xf32, #tpu.memory_space<vmem>>, %arg7: memref<8x1xf32, #tpu.memory_space<vmem>>, %arg8: memref<8x32xf32, #tpu.memory_space<vmem>>, %arg9: memref<8x32xf32, #tpu.memory_space<vmem>>) attributes {dimension_semantics = [#tpu.dimension_semantics<arbitrary>, #tpu.dimension_semantics<arbitrary>], iteration_bounds = array<i64: 2, 1>, scalar_prefetch = 0 : i64, scratch_operands = 4 : i64, tpu.core_type = #tpu.core_type<tc>, window_params = [{transform_indices = @transform_0, window_bounds = array<i64: 1, 256>}, {transform_indices = @transform_1, window_bounds = array<i64: 256, 32>}, {pipeline_mode = #tpu.pipeline_mode<synchronous>, transform_indices = @transform_2, window_bounds = array<i64: 32, 32>}, {pipeline_mode = #tpu.pipeline_mode<synchronous>, transform_indices = @transform_3, window_bounds = array<i64: 8, 32>}]} {
    %c0 = arith.constant 0 : index
    %c0_0 = arith.constant 0 : index
    %0 = vector.load %arg2[%c0, %c0_0] : memref<1x256xi32, #tpu.memory_space<vmem>>, vector<1x256xi32>
    %c0_1 = arith.constant 0 : index
    %c0_2 = arith.constant 0 : index
    %1 = vector.load %arg3[%c0_1, %c0_2] : memref<256x32xf32, #tpu.memory_space<vmem>>, vector<256x32xf32>
    %2 = tpu.iota {dimensions = array<i32: 0>} : vector<8x256xi32>
    %3 = vector.broadcast %0 : vector<1x256xi32> to vector<8x256xi32>
    %4 = arith.cmpi eq, %2, %3 : vector<8x256xi32>
    %5 = arith.extui %4 : vector<8x256xi1> to vector<8x256xi32>
    %6 = arith.sitofp %5 : vector<8x256xi32> to vector<8x256xf32>
    %c0_i32 = arith.constant 0 : i32
    %7 = arith.cmpi eq, %arg0, %c0_i32 : i32
    %c0_i32_3 = arith.constant 0 : i32
    %8 = arith.cmpi eq, %arg1, %c0_i32_3 : i32
    %9 = arith.andi %7, %8 : i1
    %10 = arith.extui %9 : i1 to i32
    %c0_i32_4 = arith.constant 0 : i32
    %11 = arith.cmpi ne, %10, %c0_i32_4 : i32
    scf.if %11 {
      %cst = arith.constant 0.000000e+00 : f32
      %28 = vector.broadcast %cst : f32 to vector<8x32xf32>
      %c0_14 = arith.constant 0 : index
      %c0_15 = arith.constant 0 : index
      %29 = vector.load %arg6[%c0_14, %c0_15] : memref<8x32xf32, #tpu.memory_space<vmem>>, vector<8x32xf32>
      tpu.vector_store %arg6[%c0_14, %c0_15], %28 {strides = array<i32>} : memref<8x32xf32, #tpu.memory_space<vmem>>, vector<8x32xf32>,
      %cst_16 = arith.constant 0.000000e+00 : f32
      %30 = vector.broadcast %cst_16 : f32 to vector<8x1xf32>
      %c0_17 = arith.constant 0 : index
      %c0_18 = arith.constant 0 : index
      %31 = vector.load %arg7[%c0_17, %c0_18] : memref<8x1xf32, #tpu.memory_space<vmem>>, vector<8x1xf32>
      tpu.vector_store %arg7[%c0_17, %c0_18], %30 {strides = array<i32>} : memref<8x1xf32, #tpu.memory_space<vmem>>, vector<8x1xf32>,
      %cst_19 = arith.constant 0.000000e+00 : f32
      %32 = vector.broadcast %cst_19 : f32 to vector<8x32xf32>
      %c0_20 = arith.constant 0 : index
      %c0_21 = arith.constant 0 : index
      %33 = vector.load %arg9[%c0_20, %c0_21] : memref<8x32xf32, #tpu.memory_space<vmem>>, vector<8x32xf32>
      tpu.vector_store %arg9[%c0_20, %c0_21], %32 {strides = array<i32>} : memref<8x32xf32, #tpu.memory_space<vmem>>, vector<8x32xf32>,
    } else {
    }
    %c0_i32_5 = arith.constant 0 : i32
    %12 = arith.cmpi eq, %arg0, %c0_i32_5 : i32
    %13 = arith.extui %12 : i1 to i32
    %c0_i32_6 = arith.constant 0 : i32
    %14 = arith.cmpi ne, %13, %c0_i32_6 : i32
    scf.if %14 {
      %c0_14 = arith.constant 0 : index
      %c0_15 = arith.constant 0 : index
      %28 = vector.load %arg6[%c0_14, %c0_15] : memref<8x32xf32, #tpu.memory_space<vmem>>, vector<8x32xf32>
      %cst = arith.constant dense<0.000000e+00> : vector<8x32xf32>
      %29 = tpu.matmul %6, %1, %cst {dimension_numbers = #tpu.dot_dimension_numbers<[1], [0], [0], [1], [0, 0, 1, 1], [], []>} : vector<8x256xf32>, vector<256x32xf32>, vector<8x32xf32> -> vector<8x32xf32>
      %30 = arith.addf %28, %29 : vector<8x32xf32>
      %c0_16 = arith.constant 0 : index
      %c0_17 = arith.constant 0 : index
      %31 = vector.load %arg6[%c0_16, %c0_17] : memref<8x32xf32, #tpu.memory_space<vmem>>, vector<8x32xf32>
      tpu.vector_store %arg6[%c0_16, %c0_17], %30 {strides = array<i32>} : memref<8x32xf32, #tpu.memory_space<vmem>>, vector<8x32xf32>,
      %c0_18 = arith.constant 0 : index
      %c0_19 = arith.constant 0 : index
      %32 = vector.load %arg7[%c0_18, %c0_19] : memref<8x1xf32, #tpu.memory_space<vmem>>, vector<8x1xf32>
      %cst_20 = arith.constant dense<0.000000e+00> : vector<8xf32>
      %33 = vector.multi_reduction <add>, %6, %cst_20 [1] : vector<8x256xf32> to vector<8xf32>
      %34 = vector.shape_cast %33 : vector<8xf32> to vector<8x1xf32>
      %35 = arith.addf %32, %34 : vector<8x1xf32>
      %c0_21 = arith.constant 0 : index
      %c0_22 = arith.constant 0 : index
      %36 = vector.load %arg7[%c0_21, %c0_22] : memref<8x1xf32, #tpu.memory_space<vmem>>, vector<8x1xf32>
      tpu.vector_store %arg7[%c0_21, %c0_22], %35 {strides = array<i32>} : memref<8x1xf32, #tpu.memory_space<vmem>>, vector<8x1xf32>,
    } else {
    }
    %c0_i32_7 = arith.constant 0 : i32
    %15 = arith.cmpi eq, %arg0, %c0_i32_7 : i32
    %c0_i32_8 = arith.constant 0 : i32
    %16 = arith.cmpi eq, %arg1, %c0_i32_8 : i32
    %17 = arith.andi %15, %16 : i1
    %18 = arith.extui %17 : i1 to i32
    %c0_i32_9 = arith.constant 0 : i32
    %19 = arith.cmpi ne, %18, %c0_i32_9 : i32
    scf.if %19 {
      %c0_14 = arith.constant 0 : index
      %c0_15 = arith.constant 0 : index
      %28 = vector.load %arg7[%c0_14, %c0_15] : memref<8x1xf32, #tpu.memory_space<vmem>>, vector<8x1xf32>
      %cst = arith.constant 1.000000e+00 : f32
      %29 = vector.broadcast %cst : f32 to vector<8x1xf32>
      %30 = arith.maximumf %28, %29 : vector<8x1xf32>
      %cst_16 = arith.constant 1.000000e+00 : f32
      %31 = vector.broadcast %cst_16 : f32 to vector<8x1xf32>
      %32 = arith.divf %31, %30 : vector<8x1xf32>
      %c0_17 = arith.constant 0 : index
      %c0_18 = arith.constant 0 : index
      %33 = vector.load %arg6[%c0_17, %c0_18] : memref<8x32xf32, #tpu.memory_space<vmem>>, vector<8x32xf32>
      %c0_19 = arith.constant 0 : index
      %c0_20 = arith.constant 0 : index
      %34 = vector.load %arg4[%c0_19, %c0_20] : memref<32x32xf32, #tpu.memory_space<vmem>>, vector<32x32xf32>
      %cst_21 = arith.constant dense<0.000000e+00> : vector<8x32xf32>
      %35 = tpu.matmul %33, %34, %cst_21 {dimension_numbers = #tpu.dot_dimension_numbers<[1], [0], [0], [1], [0, 0, 1, 1], [], []>} : vector<8x32xf32>, vector<32x32xf32>, vector<8x32xf32> -> vector<8x32xf32>
      %36 = vector.broadcast %32 : vector<8x1xf32> to vector<8x32xf32>
      %37 = arith.mulf %35, %36 : vector<8x32xf32>
      %38 = math.tanh %37 : vector<8x32xf32>
      %c0_22 = arith.constant 0 : index
      %c0_23 = arith.constant 0 : index
      %39 = vector.load %arg8[%c0_22, %c0_23] : memref<8x32xf32, #tpu.memory_space<vmem>>, vector<8x32xf32>
      tpu.vector_store %arg8[%c0_22, %c0_23], %38 {strides = array<i32>} : memref<8x32xf32, #tpu.memory_space<vmem>>, vector<8x32xf32>,
    } else {
    }
    %c1_i32 = arith.constant 1 : i32
    %20 = arith.cmpi eq, %arg0, %c1_i32 : i32
    %21 = arith.extui %20 : i1 to i32
    %c0_i32_10 = arith.constant 0 : i32
    %22 = arith.cmpi ne, %21, %c0_i32_10 : i32
    scf.if %22 {
      %c0_14 = arith.constant 0 : index
      %c0_15 = arith.constant 0 : index
      %28 = vector.load %arg8[%c0_14, %c0_15] : memref<8x32xf32, #tpu.memory_space<vmem>>, vector<8x32xf32>
      %cst = arith.constant dense<0.000000e+00> : vector<8x256xf32>
      %29 = tpu.matmul %28, %1, %cst {dimension_numbers = #tpu.dot_dimension_numbers<[1], [1], [0], [0], [0, 0, 1, 0], [], []>} : vector<8x32xf32>, vector<256x32xf32>, vector<8x256xf32> -> vector<8x256xf32>
      %30 = arith.negf %29 : vector<8x256xf32>
      %31 = math.exp %30 : vector<8x256xf32>
      %cst_16 = arith.constant 1.000000e+00 : f32
      %32 = vector.broadcast %cst_16 : f32 to vector<8x256xf32>
      %33 = arith.addf %32, %31 : vector<8x256xf32>
      %34 = arith.divf %32, %33 : vector<8x256xf32>
      %35 = arith.mulf %34, %6 : vector<8x256xf32>
      %c0_17 = arith.constant 0 : index
      %c0_18 = arith.constant 0 : index
      %36 = vector.load %arg9[%c0_17, %c0_18] : memref<8x32xf32, #tpu.memory_space<vmem>>, vector<8x32xf32>
      %cst_19 = arith.constant dense<0.000000e+00> : vector<8x32xf32>
      %37 = tpu.matmul %35, %1, %cst_19 {dimension_numbers = #tpu.dot_dimension_numbers<[1], [0], [0], [1], [0, 0, 1, 1], [], []>} : vector<8x256xf32>, vector<256x32xf32>, vector<8x32xf32> -> vector<8x32xf32>
      %38 = arith.addf %36, %37 : vector<8x32xf32>
      %c0_20 = arith.constant 0 : index
      %c0_21 = arith.constant 0 : index
      %39 = vector.load %arg9[%c0_20, %c0_21] : memref<8x32xf32, #tpu.memory_space<vmem>>, vector<8x32xf32>
      tpu.vector_store %arg9[%c0_20, %c0_21], %38 {strides = array<i32>} : memref<8x32xf32, #tpu.memory_space<vmem>>, vector<8x32xf32>,
    } else {
    }
    %c1_i32_11 = arith.constant 1 : i32
    %23 = arith.cmpi eq, %arg0, %c1_i32_11 : i32
    %c0_i32_12 = arith.constant 0 : i32
    %24 = arith.cmpi eq, %arg1, %c0_i32_12 : i32
    %25 = arith.andi %23, %24 : i1
    %26 = arith.extui %25 : i1 to i32
    %c0_i32_13 = arith.constant 0 : i32
    %27 = arith.cmpi ne, %26, %c0_i32_13 : i32
    scf.if %27 {
      %c0_14 = arith.constant 0 : index
      %c0_15 = arith.constant 0 : index
      %28 = vector.load %arg9[%c0_14, %c0_15] : memref<8x32xf32, #tpu.memory_space<vmem>>, vector<8x32xf32>
      %c0_16 = arith.constant 0 : index
      %c0_17 = arith.constant 0 : index
      %29 = vector.load %arg5[%c0_16, %c0_17] : memref<8x32xf32, #tpu.memory_space<vmem>>, vector<8x32xf32>
      tpu.vector_store %arg5[%c0_16, %c0_17], %28 {strides = array<i32>} : memref<8x32xf32, #tpu.memory_space<vmem>>, vector<8x32xf32>,
    } else {
    }
    return
  }
  func.func @transform_0(%arg0: i32, %arg1: i32) -> (i32, i32) {
    %c0_i32 = arith.constant 0 : i32
    %c0_i32_0 = arith.constant 0 : i32
    return %c0_i32, %arg1 : i32, i32
  }
  func.func @transform_1(%arg0: i32, %arg1: i32) -> (i32, i32) {
    %c0_i32 = arith.constant 0 : i32
    %c0_i32_0 = arith.constant 0 : i32
    return %arg1, %c0_i32 : i32, i32
  }
  func.func @transform_2(%arg0: i32, %arg1: i32) -> (i32, i32) {
    %c0_i32 = arith.constant 0 : i32
    %c0_i32_0 = arith.constant 0 : i32
    %c0_i32_1 = arith.constant 0 : i32
    return %c0_i32, %c0_i32_0 : i32, i32
  }
  func.func @transform_3(%arg0: i32, %arg1: i32) -> (i32, i32) {
    %c0_i32 = arith.constant 0 : i32
    %c0_i32_0 = arith.constant 0 : i32
    %c0_i32_1 = arith.constant 0 : i32
    return %c0_i32, %c0_i32_0 : i32, i32
  }
}

</mosaic_0001>

<llo_original>
// kernel: tpu_custom_call.1
$region0: #{tpu_custom_call.1}
  #allocation0 [shape = 'u32[]', space=smem, size = 0x4, offset = 0x4, fixed_abs, tag = 'smem constant byte address 0x4 - core index']
  #allocation1 [shape = 'u32[144,128]{1,0:T(1,128)}', space=vmem, size = 0x12000, scoped, tag = 'internal scratch']
  #allocation2 [shape = 'f32[8,32]{1,0:T(8,128)}', space=vmem, size = 0x1000, scoped, tag = 'scratch operand']
  #allocation3 [shape = 'f32[8,1]{1,0:T(8,128)}', space=vmem, size = 0x1000, scoped, tag = 'scratch operand']
  #allocation4 [shape = 'f32[8,32]{1,0:T(8,128)}', space=vmem, size = 0x1000, scoped, tag = 'scratch operand']
  #allocation5 [shape = 'f32[8,32]{1,0:T(8,128)}', space=vmem, size = 0x1000, scoped, tag = 'scratch operand']
  %s0 = inlined_call_operand.vmem [shape: s32[1,256], index: 0, kind: input, shape index: {}]
  %s1 = inlined_call_operand.vmem [shape: f32[256,32], index: 1, kind: input, shape index: {}]
  %s2 = inlined_call_operand.vmem [shape: f32[32,32], index: 2, kind: input, shape index: {}]
  %s3 = inlined_call_operand.hbm [shape: f32[8,32], index: 3, kind: output, shape index: {}]
  %s4 = sld [smem:[#allocation0]]
  $region65: #{tpu_custom_call.1} parent=0
    _
  %s6 = ssub.s32 1, %s4
  %s7 = scalar_select 0, %s6, %s4
  $region1: #{tpu_custom_call.1} parent=0
    #allocation6 [shape = 'u8[4096]{0}', space=vmem, size = 0x1000, scoped, tag = 'output window, operand 0, single buffered']
    #allocation7 [shape = 's32[2]{0}', space=sflag, size = 0x8, scoped, tag = 'scoped memory for tpu_custom_call.1']
    %8 = vsyncpa [#allocation7], 0
    loop: start=0, step=1, limit=4
    $region2: #{tpu_custom_call.1} parent=1 // loop_pre_header
      _
    $region3: #{tpu_custom_call.1} parent=1 // loop_header
      %s10 = sphi 0, %s14
      %p11 = scmp.ge.s32.totalorder %s10, 4
      %s17 = sphi 0, %s29
      %s18 = sphi 0, %s25
      %s19 = sphi 0, %s17
      %s20 = sphi 0, %s18
      %s21 = sphi 0, %s19
      %s22 = sphi 0, %s20
      %s32 = sphi 0, %s34
      %s35 = sphi 0, %s32
      %s36 = sphi 0, %s35
      %s52 = sphi 0, %s36
      %s58 = sphi 0, %s60
      %s61 = sphi 0, %s58
      %s62 = sphi 0, %s61
      %s78 = sphi 0, %s62
      %s82 = sphi 0, %s82
      %s84 = sphi 0, %s82
      %s85 = sphi 0, %s84
      %s99 = sphi 0, %s85
      %s103 = sphi 0, %s103
      %s105 = sphi 0, %s103
      %s106 = sphi 0, %s105
      %s120 = sphi 0, %s106
    $region4: #{tpu_custom_call.1} parent=1 // loop_header_branch
      %13 = sbr.rel (%p11) target = $region8
    $region5: #{tpu_custom_call.1} parent=1 // loop_body
      %s15 = ssub.s32 %s10, 1
      %s16 = ssub.s32 %s10, 2
      %s23 = sadd.s32 1, %s18
      %p24 = scmp.ge.s32.totalorder %s23, 1
      %s25 = scalar_select %p24, 0, %s23
      %s26 = sadd.s32 1, %s17
      %s27 = scalar_select %p24, %s26, %s17
      %p28 = scmp.ge.s32.totalorder %s27, 2
      %s29 = scalar_select %p28, 0, %s27
      %s30 = ssub.s32 %s18, %s25
      %p31 = scmp.eq.s32.totalorder %s30, 0
      %s33 = sadd.s32 %s32, 1
      %s34 = scalar_select %p31, %s32, %s33
      %p37 = pneg %p31
      %p38 = scmp.eq.s32.totalorder %s10, 1
      %p39 = por %p37, %p38
      %p40 = scmp.ne.s32.totalorder %s32, %s35
      %p41 = scmp.eq.s32.totalorder %s10, 0
      %p42 = por %p40, %p41
      %p43 = scmp.ne.s32.totalorder %s32, %s35
      %p44 = scmp.eq.s32.totalorder %s15, 1
      %p45 = por %p43, %p44
      %p46 = scmp.ne.s32.totalorder %s35, %s36
      %p47 = scmp.eq.s32.totalorder %s15, 0
      %p48 = por %p46, %p47
      %p49 = scmp.ne.s32.totalorder %s35, %s36
      %p50 = scmp.eq.s32.totalorder %s16, 1
      %p51 = por %p49, %p50
      %p53 = scmp.ne.s32.totalorder %s36, %s52
      %p54 = scmp.eq.s32.totalorder %s16, 0
      %p55 = por %p53, %p54
      %s56 = ssub.s32 %s18, %s25
      %p57 = scmp.eq.s32.totalorder %s56, 0
      %s59 = sadd.s32 %s58, 1
      %s60 = scalar_select %p57, %s58, %s59
      %p63 = pneg %p57
      %p64 = scmp.eq.s32.totalorder %s10, 1
      %p65 = por %p63, %p64
      %p66 = scmp.ne.s32.totalorder %s58, %s61
      %p67 = scmp.eq.s32.totalorder %s10, 0
      %p68 = por %p66, %p67
      %p69 = scmp.ne.s32.totalorder %s58, %s61
      %p70 = scmp.eq.s32.totalorder %s15, 1
      %p71 = por %p69, %p70
      %p72 = scmp.ne.s32.totalorder %s61, %s62
      %p73 = scmp.eq.s32.totalorder %s15, 0
      %p74 = por %p72, %p73
      %p75 = scmp.ne.s32.totalorder %s61, %s62
      %p76 = scmp.eq.s32.totalorder %s16, 1
      %p77 = por %p75, %p76
      %p79 = scmp.ne.s32.totalorder %s62, %s78
      %p80 = scmp.eq.s32.totalorder %s16, 0
      %p81 = por %p79, %p80
      %s83 = sadd.s32 %s82, 1
      %p86 = scmp.eq.s32.totalorder %s10, 1
      %p87 = scmp.ne.s32.totalorder %s82, %s84
      %p88 = scmp.eq.s32.totalorder %s10, 0
      %p89 = por %p87, %p88
      %p90 = scmp.ne.s32.totalorder %s82, %s84
      %p91 = scmp.eq.s32.totalorder %s15, 1
      %p92 = por %p90, %p91
      %p93 = scmp.ne.s32.totalorder %s84, %s85
      %p94 = scmp.eq.s32.totalorder %s15, 0
      %p95 = por %p93, %p94
      %p96 = scmp.ne.s32.totalorder %s84, %s85
      %p97 = scmp.eq.s32.totalorder %s16, 1
      %p98 = por %p96, %p97
      %p100 = scmp.ne.s32.totalorder %s85, %s99
      %p101 = scmp.eq.s32.totalorder %s16, 0
      %p102 = por %p100, %p101
      %s104 = sadd.s32 %s103, 1
      %p107 = scmp.eq.s32.totalorder %s10, 1
      %p108 = scmp.ne.s32.totalorder %s103, %s105
      %p109 = scmp.eq.s32.totalorder %s10, 0
      %p110 = por %p108, %p109
      %p111 = scmp.ne.s32.totalorder %s103, %s105
      %p112 = scmp.eq.s32.totalorder %s15, 1
      %p113 = por %p111, %p112
      %p114 = scmp.ne.s32.totalorder %s105, %s106
      %p115 = scmp.eq.s32.totalorder %s15, 0
      %p116 = por %p114, %p115
      %p117 = scmp.ne.s32.totalorder %s105, %s106
      %p118 = scmp.eq.s32.totalorder %s16, 1
      %p119 = por %p117, %p118
      %p121 = scmp.ne.s32.totalorder %s106, %s120
      %p122 = scmp.eq.s32.totalorder %s16, 0
      %p123 = por %p121, %p122
      %p124 = scmp.le.s32.totalorder 1, %s10
      %p125 = scmp.lt.s32.totalorder %s10, 3
      %p126 = pnand %p124, %p125
      %p127 = pneg %p126
      // Predicated region
      $region9: #{tpu_custom_call.1} parent=5 // pred_check
        _
      $region10: #{tpu_custom_call.1} parent=5 // pred_check_branch
        %129 = sbr.rel (%p126) target = $region12
      $region11: #{tpu_custom_call.1} parent=5 // pred_region
        %s130 = ssub.s32 %s10, 1
        // Predicated region
        $region13: #{tpu_custom_call.1} parent=11 // pred_check
          %p131 = pneg %p48
        $region14: #{tpu_custom_call.1} parent=11 // pred_check_branch
          %133 = sbr.rel (%p131) target = $region16
        $region15: #{tpu_custom_call.1} parent=11 // pred_region
          %s134 = smul.u32 2, %s20
          %p135 = scmp.lt.s32.totalorder %s134, 1
          %s136 = scalar_select %p135, %s134, 1
          %s137 = scalar_lea.vmem %s0, %s136
          %s138 = smul.u32 2, %s20
        $region16: #{tpu_custom_call.1} parent=11 // pred_fallthru
          _
        // Predicated region
        $region17: #{tpu_custom_call.1} parent=11 // pred_check
          %p139 = pneg %p74
        $region18: #{tpu_custom_call.1} parent=11 // pred_check_branch
          %141 = sbr.rel (%p139) target = $region20
        $region19: #{tpu_custom_call.1} parent=11 // pred_region
          %s142 = smul.u32 32, %s20
          %p143 = scmp.lt.s32.totalorder %s142, 31
          %s144 = scalar_select %p143, %s142, 31
          %s145 = smul.addr %s144, 8
          %s146 = scalar_lea.vmem %s1, %s145
          %s147 = smul.u32 32, %s20
        $region20: #{tpu_custom_call.1} parent=11 // pred_fallthru
          _
        // Predicated region
        $region21: #{tpu_custom_call.1} parent=11 // pred_check
          %p148 = pneg %p95
        $region22: #{tpu_custom_call.1} parent=11 // pred_check_branch
          %150 = sbr.rel (%p148) target = $region24
        $region23: #{tpu_custom_call.1} parent=11 // pred_region
          _
        $region24: #{tpu_custom_call.1} parent=11 // pred_fallthru
          _
      $region12: #{tpu_custom_call.1} parent=5 // pred_fallthru
        _
      %p151 = scmp.lt.s32.totalorder %s10, 2
      // Predicated region
      $region25: #{tpu_custom_call.1} parent=5 // pred_check
        %p152 = pneg %p151
      $region26: #{tpu_custom_call.1} parent=5 // pred_check_branch
        %154 = sbr.rel (%p152) target = $region28
      $region27: #{tpu_custom_call.1} parent=5 // pred_region
        _
      $region28: #{tpu_custom_call.1} parent=5 // pred_fallthru
        _
      %p155 = scmp.le.s32.totalorder 1, %s10
      %p156 = scmp.lt.s32.totalorder %s10, 3
      %p157 = pnand %p155, %p156
      %p158 = pneg %p157
      // Predicated region
      $region29: #{tpu_custom_call.1} parent=5 // pred_check
        _
      $region30: #{tpu_custom_call.1} parent=5 // pred_check_branch
        %160 = sbr.rel (%p157) target = $region32
      $region31: #{tpu_custom_call.1} parent=5 // pred_region
        %s161 = ssub.s32 %s10, 1
        %s162 = smul.u32 2, %s20
        %p163 = scmp.lt.s32.totalorder %s162, 1
        %s164 = scalar_select %p163, %s162, 1
        %s165 = scalar_lea.vmem %s0, %s164
        %p166 = pneg %p48
        %p167 = pneg %p45
        %s168 = smul.u32 32, %s20
        %p169 = scmp.lt.s32.totalorder %s168, 31
        %s170 = scalar_select %p169, %s168, 31
        %s171 = smul.addr %s170, 8
        %s172 = scalar_lea.vmem %s1, %s171
        %p173 = pneg %p74
        %p174 = pneg %p71
        %p175 = pneg %p95
        %p176 = pneg %p92
        %p177 = pneg %p116
        %p178 = pneg %p113
        %s179 = smul.u32 2, %s20
        %p180 = scmp.lt.s32.totalorder %s179, 1
        %s181 = scalar_select %p180, %s179, 1
        %s182 = scalar_lea.vmem %s0, %s181
        %s183 = smul.u32 2, %s20
        %s184 = smul.u32 32, %s20
        %p185 = scmp.lt.s32.totalorder %s184, 31
        %s186 = scalar_select %p185, %s184, 31
        %s187 = smul.addr %s186, 8
        %s188 = scalar_lea.vmem %s1, %s187
        %s189 = smul.u32 32, %s20
        %v190 = vld [vmem:[%s182] sm:$0x3]
        %v191 = vld [vmem:[%s188] sm:$0xff]
        %v192 = vld [vmem:[%s188 + $0x8] sm:$0xff]
        %v193 = vld [vmem:[%s188 + $0x10] sm:$0xff]
        %v194 = vld [vmem:[%s188 + $0x18] sm:$0xff]
        %v195 = vld [vmem:[%s188 + $0x20] sm:$0xff]
        %v196 = vld [vmem:[%s188 + $0x28] sm:$0xff]
        %v197 = vld [vmem:[%s188 + $0x30] sm:$0xff]
        %v198 = vld [vmem:[%s188 + $0x38] sm:$0xff]
        %v199 = vld [vmem:[%s188 + $0x40] sm:$0xff]
        %v200 = vld [vmem:[%s188 + $0x48] sm:$0xff]
        %v201 = vld [vmem:[%s188 + $0x50] sm:$0xff]
        %v202 = vld [vmem:[%s188 + $0x58] sm:$0xff]
        %v203 = vld [vmem:[%s188 + $0x60] sm:$0xff]
        %v204 = vld [vmem:[%s188 + $0x68] sm:$0xff]
        %v205 = vld [vmem:[%s188 + $0x70] sm:$0xff]
        %v206 = vld [vmem:[%s188 + $0x78] sm:$0xff]
        %v207 = vld [vmem:[%s188 + $0x80] sm:$0xff]
        %v208 = vld [vmem:[%s188 + $0x88] sm:$0xff]
        %v209 = vld [vmem:[%s188 + $0x90] sm:$0xff]
        %v210 = vld [vmem:[%s188 + $0x98] sm:$0xff]
        %v211 = vld [vmem:[%s188 + $0xa0] sm:$0xff]
        %v212 = vld [vmem:[%s188 + $0xa8] sm:$0xff]
        %v213 = vld [vmem:[%s188 + $0xb0] sm:$0xff]
        %v214 = vld [vmem:[%s188 + $0xb8] sm:$0xff]
        %v215 = vld [vmem:[%s188 + $0xc0] sm:$0xff]
        %v216 = vld [vmem:[%s188 + $0xc8] sm:$0xff]
        %v217 = vld [vmem:[%s188 + $0xd0] sm:$0xff]
        %v218 = vld [vmem:[%s188 + $0xd8] sm:$0xff]
        %v219 = vld [vmem:[%s188 + $0xe0] sm:$0xff]
        %v220 = vld [vmem:[%s188 + $0xe8] sm:$0xff]
        %v221 = vld [vmem:[%s188 + $0xf0] sm:$0xff]
        %v222 = vld [vmem:[%s188 + $0xf8] sm:$0xff]
        %v223 = vlaneseq
        %v224 = vshrl.u32 %v223, 7
        %v225 = vlaneseq
        %v226 = vshrl.u32 %v225, 7
        %v227 = vsub.s32 0, %v226
        %v228 = vrot.slane %v190, %v227
        %v229 = vlaneseq
        %v230 = vshrl.u32 %v229, 7
        %v231 = vsub.s32 1, %v230
        %v232 = vrot.slane %v190, %v231
        %vm233 = vcmp.eq.s32.totalorder %v224, %v228
        %vm234 = vcmp.eq.s32.totalorder %v224, %v232
        %v235 = vsel %vm233, 1, 0
        %v236 = vsel %vm234, 1, 0
        %v237 = vcvt.s32.f32 %v235
        %v238 = vcvt.s32.f32 %v236
        %p239 = scmp.eq.s32.totalorder %s19, 0
        %p240 = scmp.eq.s32.totalorder %s20, 0
        %p241 = pnand %p239, %p240
        %p242 = pneg %p241
        // Predicated region
        $region33: #{tpu_custom_call.1} parent=31 // pred_check
          _
        $region34: #{tpu_custom_call.1} parent=31 // pred_check_branch
          %244 = sbr.rel (%p241) target = $region36
        $region35: #{tpu_custom_call.1} parent=31 // pred_region
          %vm245 = vcmask 261120
          %246 = vst.msk [vmem:[#allocation2] sm:$0xff] %vm245, 0.0
          %vm247 = vcmask 7168
          %248 = vst.msk [vmem:[#allocation3] sm:$0xff] %vm247, 0.0
          %249 = vst.msk [vmem:[#allocation5] sm:$0xff] %vm245, 0.0
        $region36: #{tpu_custom_call.1} parent=31 // pred_fallthru
          _
        // Predicated region
        $region37: #{tpu_custom_call.1} parent=31 // pred_check
          %p250 = pneg %p239
        $region38: #{tpu_custom_call.1} parent=31 // pred_check_branch
          %252 = sbr.rel (%p250) target = $region40
        $region39: #{tpu_custom_call.1} parent=31 // pred_region
          %v253 = vld [vmem:[#allocation2] sm:$0xff]
          %254 = vmatprep.subr.mxu0 0.0
          %255 = vmatpush1.msra.mxu0 %v206
          %256 = vmatprep.subr.mxu0 0.0
          %257 = vmatpush1.msra.mxu0 %v205
          %258 = vmatprep.subr.mxu0 0.0
          %259 = vmatpush1.msra.mxu0 %v204
          %260 = vmatprep.subr.mxu0 0.0
          %261 = vmatpush1.msra.mxu0 %v203
          %262 = vmatprep.subr.mxu0 0.0
          %263 = vmatpush1.msra.mxu0 %v202
          %264 = vmatprep.subr.mxu0 0.0
          %265 = vmatpush1.msra.mxu0 %v201
          %266 = vmatprep.subr.mxu0 0.0
          %267 = vmatpush1.msra.mxu0 %v200
          %268 = vmatprep.subr.mxu0 0.0
          %269 = vmatpush1.msra.mxu0 %v199
          %270 = vmatprep.subr.mxu0 0.0
          %271 = vmatpush1.msra.mxu0 %v198
          %272 = vmatprep.subr.mxu0 0.0
          %273 = vmatpush1.msra.mxu0 %v197
          %274 = vmatprep.subr.mxu0 0.0
          %275 = vmatpush1.msra.mxu0 %v196
          %276 = vmatprep.subr.mxu0 0.0
          %277 = vmatpush1.msra.mxu0 %v195
          %278 = vmatprep.subr.mxu0 0.0
          %279 = vmatpush1.msra.mxu0 %v194
          %280 = vmatprep.subr.mxu0 0.0
          %281 = vmatpush1.msra.mxu0 %v193
          %282 = vmatprep.subr.mxu0 0.0
          %283 = vmatpush1.msra.mxu0 %v192
          %284 = vmatprep.subr.mxu0 0.0
          %285 = vmatpush1.msra.mxu0 %v191
          %286 = vmatprep.subr.mxu0 0.0
          %287 = vmatpush2.msra.mxu0 %v222
          %288 = vmatprep.subr.mxu0 0.0
          %289 = vmatpush2.msra.mxu0 %v221
          %290 = vmatprep.subr.mxu0 0.0
          %291 = vmatpush2.msra.mxu0 %v220
          %292 = vmatprep.subr.mxu0 0.0
          %293 = vmatpush2.msra.mxu0 %v219
          %294 = vmatprep.subr.mxu0 0.0
          %295 = vmatpush2.msra.mxu0 %v218
          %296 = vmatprep.subr.mxu0 0.0
          %297 = vmatpush2.msra.mxu0 %v217
          %298 = vmatprep.subr.mxu0 0.0
          %299 = vmatpush2.msra.mxu0 %v216
          %300 = vmatprep.subr.mxu0 0.0
          %301 = vmatpush2.msra.mxu0 %v215
          %302 = vmatprep.subr.mxu0 0.0
          %303 = vmatpush2.msra.mxu0 %v214
          %304 = vmatprep.subr.mxu0 0.0
          %305 = vmatpush2.msra.mxu0 %v213
          %306 = vmatprep.subr.mxu0 0.0
          %307 = vmatpush2.msra.mxu0 %v212
          %308 = vmatprep.subr.mxu0 0.0
          %309 = vmatpush2.msra.mxu0 %v211
          %310 = vmatprep.subr.mxu0 0.0
          %311 = vmatpush2.msra.mxu0 %v210
          %312 = vmatprep.subr.mxu0 0.0
          %313 = vmatpush2.msra.mxu0 %v209
          %314 = vmatprep.subr.mxu0 0.0
          %315 = vmatpush2.msra.mxu0 %v208
          %316 = vmatprep.subr.mxu0 0.0
          %317 = vmatpush2.msra.mxu0 %v207
          %318 = vmatprep.mubr.f32.mxu0 %v238
          %319 = vmatmul.mubr.f32.gmra.mxu0 %v237
          %v320 = vpop.f32.mrf.mxu0
          %v321 = vadd.f32 0.0, %v320
          %v322 = vpop.f32.mrf.mxu0
          %323 = vdwg.mxu0
          %v324 = vadd.f32 %v253, %v321
          %vm325 = vcmask 261120
          %326 = vst.msk [vmem:[#allocation2] sm:$0xff] %vm325, %v324
          %v327 = vld [vmem:[#allocation3] sm:$0xff]
          %v328 = vadd.f32 %v237, %v238
          %329 = vadd.xlane.f32.xlu0 %v328
          %v330 = vpop.xlane.xlu0 %329
          %v331 = vadd.f32 %v327, %v330
          %vm332 = vcmask 7168
          %333 = vst.msk [vmem:[#allocation3] sm:$0xff] %vm332, %v331
        $region40: #{tpu_custom_call.1} parent=31 // pred_fallthru
          _
        // Predicated region
        $region41: #{tpu_custom_call.1} parent=31 // pred_check
          _
        $region42: #{tpu_custom_call.1} parent=31 // pred_check_branch
          %335 = sbr.rel (%p241) target = $region44
        $region43: #{tpu_custom_call.1} parent=31 // pred_region
          %v336 = vld [vmem:[#allocation3] sm:$0xff]
          %v337 = vmax.f32 %v336, 1.0
          %v338 = vrcp.pop %v337
          %v339 = vmul.f32 1.0, %v338
          %v340 = vld [vmem:[#allocation2] sm:$0xff]
          %v341 = vld [vmem:[%s2] sm:$0xff]
          %v342 = vld [vmem:[%s2 + $0x8] sm:$0xff]
          %v343 = vld [vmem:[%s2 + $0x10] sm:$0xff]
          %v344 = vld [vmem:[%s2 + $0x18] sm:$0xff]
          %vm345 = vcmask 261120
          %v347 = vsel %vm345, %v340, 0
          %349 = vmatprep.subr.mxu0 0.0
          %350 = vmatpush1.msra.mxu0 0.0
          %351 = vmatprep.subr.mxu0 0.0
          %352 = vmatpush1.msra.mxu0 0.0
          %353 = vmatprep.subr.mxu0 0.0
          %354 = vmatpush1.msra.mxu0 0.0
          %355 = vmatprep.subr.mxu0 0.0
          %356 = vmatpush1.msra.mxu0 0.0
          %357 = vmatprep.subr.mxu0 0.0
          %358 = vmatpush1.msra.mxu0 0.0
          %359 = vmatprep.subr.mxu0 0.0
          %360 = vmatpush1.msra.mxu0 0.0
          %361 = vmatprep.subr.mxu0 0.0
          %362 = vmatpush1.msra.mxu0 0.0
          %363 = vmatprep.subr.mxu0 0.0
          %364 = vmatpush1.msra.mxu0 0.0
          %365 = vmatprep.subr.mxu0 0.0
          %366 = vmatpush1.msra.mxu0 0.0
          %367 = vmatprep.subr.mxu0 0.0
          %368 = vmatpush1.msra.mxu0 0.0
          %369 = vmatprep.subr.mxu0 0.0
          %370 = vmatpush1.msra.mxu0 0.0
          %371 = vmatprep.subr.mxu0 0.0
          %372 = vmatpush1.msra.mxu0 0.0
          %373 = vmatprep.subr.mxu0 0.0
          %374 = vmatpush1.msra.mxu0 %v344
          %375 = vmatprep.subr.mxu0 0.0
          %376 = vmatpush1.msra.mxu0 %v343
          %377 = vmatprep.subr.mxu0 0.0
          %378 = vmatpush1.msra.mxu0 %v342
          %379 = vmatprep.subr.mxu0 0.0
          %380 = vmatpush1.msra.mxu0 %v341
          %381 = vmatprep.subr.mxu0 0.0
          %382 = vmatpush2.msra.mxu0 0.0
          %383 = vmatprep.subr.mxu0 0.0
          %384 = vmatpush2.msra.mxu0 0.0
          %385 = vmatprep.subr.mxu0 0.0
          %386 = vmatpush2.msra.mxu0 0.0
          %387 = vmatprep.subr.mxu0 0.0
          %388 = vmatpush2.msra.mxu0 0.0
          %389 = vmatprep.subr.mxu0 0.0
          %390 = vmatpush2.msra.mxu0 0.0
          %391 = vmatprep.subr.mxu0 0.0
          %392 = vmatpush2.msra.mxu0 0.0
          %393 = vmatprep.subr.mxu0 0.0
          %394 = vmatpush2.msra.mxu0 0.0
          %395 = vmatprep.subr.mxu0 0.0
          %396 = vmatpush2.msra.mxu0 0.0
          %397 = vmatprep.subr.mxu0 0.0
          %398 = vmatpush2.msra.mxu0 0.0
          %399 = vmatprep.subr.mxu0 0.0
          %400 = vmatpush2.msra.mxu0 0.0
          %401 = vmatprep.subr.mxu0 0.0
          %402 = vmatpush2.msra.mxu0 0.0
          %403 = vmatprep.subr.mxu0 0.0
          %404 = vmatpush2.msra.mxu0 0.0
          %405 = vmatprep.subr.mxu0 0.0
          %406 = vmatpush2.msra.mxu0 0.0
          %407 = vmatprep.subr.mxu0 0.0
          %408 = vmatpush2.msra.mxu0 0.0
          %409 = vmatprep.subr.mxu0 0.0
          %410 = vmatpush2.msra.mxu0 0.0
          %411 = vmatprep.subr.mxu0 0.0
          %412 = vmatpush2.msra.mxu0 0.0
          %413 = vmatprep.mubr.f32.mxu0 0.0
          %414 = vmatmul.mubr.f32.gmra.mxu0 %v347
          %v415 = vpop.f32.mrf.mxu0
          %v416 = vadd.f32 0.0, %v415
          %v417 = vpop.f32.mrf.mxu0
          %418 = vdwg.mxu0
          %420 = vset.pattern.permute.xlu0 0
          %421 = vperm.xlu0 %420, %v339
          %v422 = vpop.permute.xlu0 %421
          %v424 = vmul.f32 %v416, %v422
          %v425 = vtanh.pop %v424
          %426 = vst.msk [vmem:[#allocation4] sm:$0xff] %vm345, %v425
        $region44: #{tpu_custom_call.1} parent=31 // pred_fallthru
          _
        %p427 = scmp.eq.s32.totalorder %s19, 1
        // Predicated region
        $region45: #{tpu_custom_call.1} parent=31 // pred_check
          %p428 = pneg %p427
        $region46: #{tpu_custom_call.1} parent=31 // pred_check_branch
          %430 = sbr.rel (%p428) target = $region48
        $region47: #{tpu_custom_call.1} parent=31 // pred_region
          %v431 = vld [vmem:[#allocation4] sm:$0xff]
          %vm432 = vcmask 261120
          %v434 = vsel %vm432, %v431, 0
          %v437 = vsel %vm432, %v191, 0
          %v440 = vsel %vm432, %v192, 0
          %v443 = vsel %vm432, %v193, 0
          %v446 = vsel %vm432, %v194, 0
          %v449 = vsel %vm432, %v195, 0
          %v452 = vsel %vm432, %v196, 0
          %v455 = vsel %vm432, %v197, 0
          %v458 = vsel %vm432, %v198, 0
          %v461 = vsel %vm432, %v199, 0
          %v464 = vsel %vm432, %v200, 0
          %v467 = vsel %vm432, %v201, 0
          %v470 = vsel %vm432, %v202, 0
          %v473 = vsel %vm432, %v203, 0
          %v476 = vsel %vm432, %v204, 0
          %v479 = vsel %vm432, %v205, 0
          %v482 = vsel %vm432, %v206, 0
          %v485 = vsel %vm432, %v207, 0
          %v488 = vsel %vm432, %v208, 0
          %v491 = vsel %vm432, %v209, 0
          %v494 = vsel %vm432, %v210, 0
          %v497 = vsel %vm432, %v211, 0
          %v500 = vsel %vm432, %v212, 0
          %v503 = vsel %vm432, %v213, 0
          %v506 = vsel %vm432, %v214, 0
          %v509 = vsel %vm432, %v215, 0
          %v512 = vsel %vm432, %v216, 0
          %v515 = vsel %vm432, %v217, 0
          %v518 = vsel %vm432, %v218, 0
          %v521 = vsel %vm432, %v219, 0
          %v524 = vsel %vm432, %v220, 0
          %v527 = vsel %vm432, %v221, 0
          %v530 = vsel %vm432, %v222, 0
          %532 = vmatprep.subr.mxu0 0.0
          %533 = vmatpush1.xpose.msra.mxu0 %v482
          %534 = vmatprep.subr.mxu0 0.0
          %535 = vmatpush1.xpose.msra.mxu0 %v479
          %536 = vmatprep.subr.mxu0 0.0
          %537 = vmatpush1.xpose.msra.mxu0 %v476
          %538 = vmatprep.subr.mxu0 0.0
          %539 = vmatpush1.xpose.msra.mxu0 %v473
          %540 = vmatprep.subr.mxu0 0.0
          %541 = vmatpush1.xpose.msra.mxu0 %v470
          %542 = vmatprep.subr.mxu0 0.0
          %543 = vmatpush1.xpose.msra.mxu0 %v467
          %544 = vmatprep.subr.mxu0 0.0
          %545 = vmatpush1.xpose.msra.mxu0 %v464
          %546 = vmatprep.subr.mxu0 0.0
          %547 = vmatpush1.xpose.msra.mxu0 %v461
          %548 = vmatprep.subr.mxu0 0.0
          %549 = vmatpush1.xpose.msra.mxu0 %v458
          %550 = vmatprep.subr.mxu0 0.0
          %551 = vmatpush1.xpose.msra.mxu0 %v455
          %552 = vmatprep.subr.mxu0 0.0
          %553 = vmatpush1.xpose.msra.mxu0 %v452
          %554 = vmatprep.subr.mxu0 0.0
          %555 = vmatpush1.xpose.msra.mxu0 %v449
          %556 = vmatprep.subr.mxu0 0.0
          %557 = vmatpush1.xpose.msra.mxu0 %v446
          %558 = vmatprep.subr.mxu0 0.0
          %559 = vmatpush1.xpose.msra.mxu0 %v443
          %560 = vmatprep.subr.mxu0 0.0
          %561 = vmatpush1.xpose.msra.mxu0 %v440
          %562 = vmatprep.subr.mxu0 0.0
          %563 = vmatpush1.xpose.msra.mxu0 %v437
          %564 = vmatprep.subr.mxu0 0.0
          %565 = vmatpush2.xpose.msra.mxu0 %v530
          %566 = vmatprep.subr.mxu0 0.0
          %567 = vmatpush2.xpose.msra.mxu0 %v527
          %568 = vmatprep.subr.mxu0 0.0
          %569 = vmatpush2.xpose.msra.mxu0 %v524
          %570 = vmatprep.subr.mxu0 0.0
          %571 = vmatpush2.xpose.msra.mxu0 %v521
          %572 = vmatprep.subr.mxu0 0.0
          %573 = vmatpush2.xpose.msra.mxu0 %v518
          %574 = vmatprep.subr.mxu0 0.0
          %575 = vmatpush2.xpose.msra.mxu0 %v515
          %576 = vmatprep.subr.mxu0 0.0
          %577 = vmatpush2.xpose.msra.mxu0 %v512
          %578 = vmatprep.subr.mxu0 0.0
          %579 = vmatpush2.xpose.msra.mxu0 %v509
          %580 = vmatprep.subr.mxu0 0.0
          %581 = vmatpush2.xpose.msra.mxu0 %v506
          %582 = vmatprep.subr.mxu0 0.0
          %583 = vmatpush2.xpose.msra.mxu0 %v503
          %584 = vmatprep.subr.mxu0 0.0
          %585 = vmatpush2.xpose.msra.mxu0 %v500
          %586 = vmatprep.subr.mxu0 0.0
          %587 = vmatpush2.xpose.msra.mxu0 %v497
          %588 = vmatprep.subr.mxu0 0.0
          %589 = vmatpush2.xpose.msra.mxu0 %v494
          %590 = vmatprep.subr.mxu0 0.0
          %591 = vmatpush2.xpose.msra.mxu0 %v491
          %592 = vmatprep.subr.mxu0 0.0
          %593 = vmatpush2.xpose.msra.mxu0 %v488
          %594 = vmatprep.subr.mxu0 0.0
          %595 = vmatpush2.xpose.msra.mxu0 %v485
          %596 = vmatprep.mubr.f32.mxu0 0.0
          %597 = vmatmul.mubr.f32.gmra.mxu0 %v434
          %v598 = vpop.f32.mrf.mxu0
          %v599 = vadd.f32 0.0, %v598
          %v600 = vpop.f32.mrf.mxu0
          %v601 = vadd.f32 0.0, %v600
          %602 = vdwg.mxu0
          %v603 = vxor.u32 %v599, 2147483648
          %v604 = vxor.u32 %v601, 2147483648
          %v605 = vmul.f32 %v603, 1.442695
          %v606 = vpow.pop %v605
          %v607 = vmul.f32 %v604, 1.442695
          %v608 = vpow.pop %v607
          %v609 = vadd.f32 %v606, 1.0
          %v610 = vadd.f32 %v608, 1.0
          %v611 = vrcp.pop %v609
          %v612 = vmul.f32 1.0, %v611
          %v613 = vrcp.pop %v610
          %v614 = vmul.f32 1.0, %v613
          %v615 = vmul.f32 %v612, %v237
          %v616 = vmul.f32 %v614, %v238
          %v617 = vld [vmem:[#allocation5] sm:$0xff]
          %618 = vmatprep.subr.mxu0 0.0
          %619 = vmatpush1.msra.mxu0 %v206
          %620 = vmatprep.subr.mxu0 0.0
          %621 = vmatpush1.msra.mxu0 %v205
          %622 = vmatprep.subr.mxu0 0.0
          %623 = vmatpush1.msra.mxu0 %v204
          %624 = vmatprep.subr.mxu0 0.0
          %625 = vmatpush1.msra.mxu0 %v203
          %626 = vmatprep.subr.mxu0 0.0
          %627 = vmatpush1.msra.mxu0 %v202
          %628 = vmatprep.subr.mxu0 0.0
          %629 = vmatpush1.msra.mxu0 %v201
          %630 = vmatprep.subr.mxu0 0.0
          %631 = vmatpush1.msra.mxu0 %v200
          %632 = vmatprep.subr.mxu0 0.0
          %633 = vmatpush1.msra.mxu0 %v199
          %634 = vmatprep.subr.mxu0 0.0
          %635 = vmatpush1.msra.mxu0 %v198
          %636 = vmatprep.subr.mxu0 0.0
          %637 = vmatpush1.msra.mxu0 %v197
          %638 = vmatprep.subr.mxu0 0.0
          %639 = vmatpush1.msra.mxu0 %v196
          %640 = vmatprep.subr.mxu0 0.0
          %641 = vmatpush1.msra.mxu0 %v195
          %642 = vmatprep.subr.mxu0 0.0
          %643 = vmatpush1.msra.mxu0 %v194
          %644 = vmatprep.subr.mxu0 0.0
          %645 = vmatpush1.msra.mxu0 %v193
          %646 = vmatprep.subr.mxu0 0.0
          %647 = vmatpush1.msra.mxu0 %v192
          %648 = vmatprep.subr.mxu0 0.0
          %649 = vmatpush1.msra.mxu0 %v191
          %650 = vmatprep.subr.mxu0 0.0
          %651 = vmatpush2.msra.mxu0 %v222
          %652 = vmatprep.subr.mxu0 0.0
          %653 = vmatpush2.msra.mxu0 %v221
          %654 = vmatprep.subr.mxu0 0.0
          %655 = vmatpush2.msra.mxu0 %v220
          %656 = vmatprep.subr.mxu0 0.0
          %657 = vmatpush2.msra.mxu0 %v219
          %658 = vmatprep.subr.mxu0 0.0
          %659 = vmatpush2.msra.mxu0 %v218
          %660 = vmatprep.subr.mxu0 0.0
          %661 = vmatpush2.msra.mxu0 %v217
          %662 = vmatprep.subr.mxu0 0.0
          %663 = vmatpush2.msra.mxu0 %v216
          %664 = vmatprep.subr.mxu0 0.0
          %665 = vmatpush2.msra.mxu0 %v215
          %666 = vmatprep.subr.mxu0 0.0
          %667 = vmatpush2.msra.mxu0 %v214
          %668 = vmatprep.subr.mxu0 0.0
          %669 = vmatpush2.msra.mxu0 %v213
          %670 = vmatprep.subr.mxu0 0.0
          %671 = vmatpush2.msra.mxu0 %v212
          %672 = vmatprep.subr.mxu0 0.0
          %673 = vmatpush2.msra.mxu0 %v211
          %674 = vmatprep.subr.mxu0 0.0
          %675 = vmatpush2.msra.mxu0 %v210
          %676 = vmatprep.subr.mxu0 0.0
          %677 = vmatpush2.msra.mxu0 %v209
          %678 = vmatprep.subr.mxu0 0.0
          %679 = vmatpush2.msra.mxu0 %v208
          %680 = vmatprep.subr.mxu0 0.0
          %681 = vmatpush2.msra.mxu0 %v207
          %682 = vmatprep.mubr.f32.mxu0 %v616
          %683 = vmatmul.mubr.f32.gmra.mxu0 %v615
          %v684 = vpop.f32.mrf.mxu0
          %v685 = vadd.f32 0.0, %v684
          %v686 = vpop.f32.mrf.mxu0
          %687 = vdwg.mxu0
          %v688 = vadd.f32 %v617, %v685
          %689 = vst.msk [vmem:[#allocation5] sm:$0xff] %vm432, %v688
        $region48: #{tpu_custom_call.1} parent=31 // pred_fallthru
          _
        %p690 = pnand %p427, %p240
        %p691 = pneg %p690
        // Predicated region
        $region49: #{tpu_custom_call.1} parent=31 // pred_check
          _
        $region50: #{tpu_custom_call.1} parent=31 // pred_check_branch
          %693 = sbr.rel (%p690) target = $region52
        $region51: #{tpu_custom_call.1} parent=31 // pred_region
          %v694 = vld [vmem:[#allocation5] sm:$0xff]
          %vm695 = vcmask 261120
          %696 = vst.msk [vmem:[#allocation6] sm:$0xff] %vm695, %v694
        $region52: #{tpu_custom_call.1} parent=31 // pred_fallthru
          _
        // Predicated region
        $region53: #{tpu_custom_call.1} parent=31 // pred_check
          %p697 = pneg %p113
        $region54: #{tpu_custom_call.1} parent=31 // pred_check_branch
          %699 = sbr.rel (%p697) target = $region56
        $region55: #{tpu_custom_call.1} parent=31 // pred_region
          %s701 = ssub.s32 128, 128
          %702 = vsyncadd [#allocation7], %s701
          %s704 = sshll.u32 [#allocation6], 4
          %s705 = int_to_ptr.vmem [resolvable:$true] %s704
          %707 = dma.vmem_to_hbm [thread:$0]  %s705, 128, %s3, [#allocation7]
        $region56: #{tpu_custom_call.1} parent=31 // pred_fallthru
          _
        // Predicated region
        $region57: #{tpu_custom_call.1} parent=31 // pred_check
          %p708 = pneg %p113
        $region58: #{tpu_custom_call.1} parent=31 // pred_check_branch
          %710 = sbr.rel (%p708) target = $region60
        $region59: #{tpu_custom_call.1} parent=31 // pred_region
          %711 = dma.done [#allocation7], 128
        $region60: #{tpu_custom_call.1} parent=31 // pred_fallthru
          _
      $region32: #{tpu_custom_call.1} parent=5 // pred_fallthru
        _
      %p712 = scmp.le.s32.totalorder 2, %s10
      // Predicated region
      $region61: #{tpu_custom_call.1} parent=5 // pred_check
        %p713 = pneg %p712
      $region62: #{tpu_custom_call.1} parent=5 // pred_check_branch
        %715 = sbr.rel (%p713) target = $region64
      $region63: #{tpu_custom_call.1} parent=5 // pred_region
        %s716 = ssub.s32 %s10, 2
      $region64: #{tpu_custom_call.1} parent=5 // pred_fallthru
        _
    $region6: #{tpu_custom_call.1} parent=1 // loop_footer
      %s14 = sadd.s32 1, %s10
    $region7: #{tpu_custom_call.1} parent=1 // loop_footer_branch
      %9 = sbr.rel target = $region3
    $region8: #{tpu_custom_call.1} parent=1 // loop_exit
      _
    %717 = vsyncpa [#allocation7], 1
    %s718 = scalar_lea.sflag [#allocation7], 1
    %719 = vsyncpa %s718, 1

</llo_original>
